<compile_context>
chip_gen: v6e
topology: v6e:2x2x1
jax: 0.10.0
libtpu: 0.0.40
codegen_flags: <defaults>
</compile_context>

<pallas_src>
import math
from functools import partial

import jax
import jax.numpy as jnp
from jax import lax
from jax.experimental import pallas as pl
from jax.experimental.pallas import tpu as pltpu

BN_EPS = 1e-3


def _round_up(v, m):
    return (v + m - 1) // m * m


def _param_layout(n_hidden, hidden_dim, o_dim):
    """Row offsets of each parameter inside the packed (R, W) slab.

    Every section starts on an 8-row (sublane) boundary and at lane 0, so all
    in-kernel slices are trivially aligned.
    """
    H = hidden_dim
    two_o = 2 * o_dim
    W = _round_up(max(H, two_o), 128)          # lane-dense slab width
    w_rows = _round_up(H, 8)
    offs = {"w": [], "b": []}
    cur = 0
    for _ in range(n_hidden):                  # FCResBlock weights (H, H), (in, out)
        offs["w"].append(cur)
        cur += w_rows
    offs["wp"] = cur                           # fc_params weight (H, 2*o_dim)
    cur += w_rows
    for _ in range(n_hidden):                  # FCResBlock biases, one 8-row slot each
        offs["b"].append(cur)
        cur += 8
    offs["bp"] = cur                           # fc_params bias
    cur += 8
    offs["gamma"] = cur                        # BN gamma (scalar, lane 0)
    cur += 8
    offs["beta"] = cur                         # BN beta  (scalar, lane 0)
    cur += 8
    return offs, cur, W


def _make_postpool_kernel(n_hidden, hidden_dim, o_dim, layout):
    """Fused PostPool kernel for static depth / widths."""
    H = hidden_dim
    two_o = 2 * o_dim
    offs, _, _ = layout

    def kernel(x_ref, p_ref, out_ref):
        x = x_ref[...]                                   # (B, H) f32, resident in VMEM
        e = x

        # ---- FCResBlock: n Linear layers, ReLU between, then ReLU(e + x) ----
        for i in range(n_hidden):
            r = offs["w"][i]
            w = p_ref[r:r + H, :][:, :H]                 # (H, H) pre-transposed (in, out)
            rb = offs["b"][i]
            b = p_ref[rb:rb + 1, :][:, :H]               # (1, H)
            e = jnp.dot(e, w, preferred_element_type=jnp.float32) + b
            if i < n_hidden - 1:
                e = jnp.maximum(e, 0.0)
        e = jnp.maximum(e + x, 0.0)                      # residual + ReLU

        # ---- fc_params: Linear(H -> 2*o_dim) ----
        rp = offs["wp"]
        wp = p_ref[rp:rp + H, :][:, :two_o]              # (H, 2*o_dim)
        bp = p_ref[offs["bp"]:offs["bp"] + 1, :][:, :two_o]
        z = jnp.dot(e, wp, preferred_element_type=jnp.float32) + bp

        # ---- BatchNorm1d(1), training mode, one-pass fused statistics ----
        inv_n = 1.0 / float(z.shape[0] * z.shape[1])
        s1 = jnp.sum(z, keepdims=True)                   # (1, 1)
        s2 = jnp.sum(z * z, keepdims=True)               # (1, 1)
        mu = s1 * inv_n
        var = s2 * inv_n - mu * mu                       # biased variance (PyTorch norm)
        gamma = p_ref[offs["gamma"]:offs["gamma"] + 1, :][:, :1]   # (1, 1)
        beta = p_ref[offs["beta"]:offs["beta"] + 1, :][:, :1]      # (1, 1)
        out_ref[...] = (z - mu) * lax.rsqrt(var + BN_EPS) * gamma + beta

    return kernel


def init_params(key, n_hidden, hidden_dim, o_dim):
    """PyTorch-Linear-style uniform init. Weights already transposed to (in, out)."""
    ws, bs = [], []
    dims = [(hidden_dim, hidden_dim)] * n_hidden + [(hidden_dim, 2 * o_dim)]
    for li, (din, dout) in enumerate(dims):
        kw, kb = jax.random.split(jax.random.fold_in(key, li))
        bound = 1.0 / math.sqrt(din)
        w = jax.random.uniform(kw, (din, dout), jnp.float32, -bound, bound)
        b = jax.random.uniform(kb, (dout,), jnp.float32, -bound, bound)
        if li < n_hidden:
            ws.append(w)
            bs.append(b)
        else:
            wp, bp = w, b
    gamma = jnp.float32(1.0)   # BatchNorm1d affine defaults
    beta = jnp.float32(0.0)
    return ws, bs, wp, bp, gamma, beta


def pack_params(raw, n_hidden, hidden_dim, o_dim):
    """Pack all parameters into one lane-dense (R, 128k) f32 slab (single DMA)."""
    ws, bs, wp, bp, gamma, beta = raw
    H = hidden_dim
    two_o = 2 * o_dim
    offs, R, W = _param_layout(n_hidden, hidden_dim, o_dim)
    slab = jnp.zeros((R, W), jnp.float32)
    for i in range(n_hidden):
        slab = slab.at[offs["w"][i]:offs["w"][i] + H, :H].set(ws[i])
        slab = slab.at[offs["b"][i], :H].set(bs[i])
    slab = slab.at[offs["wp"]:offs["wp"] + H, :two_o].set(wp)
    slab = slab.at[offs["bp"], :two_o].set(bp)
    slab = slab.at[offs["gamma"], 0].set(gamma)
    slab = slab.at[offs["beta"], 0].set(beta)
    return slab


@partial(jax.jit, static_argnames=("n_hidden", "hidden_dim", "o_dim"))
def post_pool_forward(e, param_slab, *, n_hidden, hidden_dim, o_dim):
    """PostPool forward. e: (B, hidden_dim). Returns (mean, logvar), each (B, o_dim)."""
    B = e.shape[0]
    two_o = 2 * o_dim
    layout = _param_layout(n_hidden, hidden_dim, o_dim)

    vmem = pl.BlockSpec(memory_space=pltpu.MemorySpace.VMEM)
    cost = pl.CostEstimate(
        flops=2 * B * hidden_dim * hidden_dim * n_hidden
        + 2 * B * hidden_dim * two_o
        + 8 * B * two_o,
        transcendentals=1,  # rsqrt
        bytes_accessed=e.size * 4 + param_slab.size * 4 + B * two_o * 4,
    )

    out = pl.pallas_call(
        _make_postpool_kernel(n_hidden, hidden_dim, o_dim, layout),
        out_shape=jax.ShapeDtypeStruct((B, two_o), jnp.float32),
        in_specs=[vmem, vmem],
        out_specs=vmem,
        cost_estimate=cost,
    )(e.astype(jnp.float32), param_slab)

    # (mean, logvar) split — cheap layout glue fused under jit.  Callers that
    # want the raw lane-contiguous block can use `out` directly.
    return out[:, :o_dim], out[:, o_dim:]


def reference_postpool(e, raw, n_hidden, o_dim):
    """Pure-JAX reference (two-pass BN variance) for correctness checking."""
    ws, bs, wp, bp, gamma, beta = raw
    x0 = e.astype(jnp.float32)
    h = x0
    for i in range(n_hidden):
        h = h @ ws[i] + bs[i]
        if i < n_hidden - 1:
            h = jnp.maximum(h, 0.0)
    h = jnp.maximum(h + x0, 0.0)
    z = h @ wp + bp
    mu = jnp.mean(z)
    var = jnp.mean((z - mu) ** 2)
    z = (z - mu) / jnp.sqrt(var + BN_EPS) * gamma + beta
    return z[:, :o_dim], z[:, o_dim:]


if __name__ == "__main__":
    N_HIDDEN, HIDDEN_DIM, O_DIM, BATCH = 3, 32, 16, 8

    key = jax.random.PRNGKey(0)
    kx, kp = jax.random.split(key)
    x = jax.random.normal(kx, (BATCH, HIDDEN_DIM), jnp.float32)

    ws, bs, wp, bp, _, _ = init_params(kp, N_HIDDEN, HIDDEN_DIM, O_DIM)
    # Non-trivial BN affine params so the gamma/beta slab reads are exercised.
    raw = (ws, bs, wp, bp, jnp.float32(1.25), jnp.float32(-0.5))
    slab = pack_params(raw, N_HIDDEN, HIDDEN_DIM, O_DIM)  # packed ONCE at init

    mean, logvar = post_pool_forward(
        x, slab, n_hidden=N_HIDDEN, hidden_dim=HIDDEN_DIM, o_dim=O_DIM)
    mean = jax.block_until_ready(mean)
    logvar = jax.block_until_ready(logvar)

    assert mean.shape == (BATCH, O_DIM), mean.shape
    assert logvar.shape == (BATCH, O_DIM), logvar.shape

    ref_mean, ref_logvar = reference_postpool(x, raw, N_HIDDEN, O_DIM)
    if not (jnp.allclose(mean, ref_mean, rtol=1e-4, atol=1e-4)
            and jnp.allclose(logvar, ref_logvar, rtol=1e-4, atol=1e-4)):
        raise AssertionError("Pallas output does not match pure-JAX reference")

    # Amortized/batched path (review item 1): same kernel, many rows per call.
    xb = jax.random.normal(jax.random.fold_in(key, 7), (128, HIDDEN_DIM), jnp.float32)
    mb, lb = post_pool_forward(
        xb, slab, n_hidden=N_HIDDEN, hidden_dim=HIDDEN_DIM, o_dim=O_DIM)
    mb = jax.block_until_ready(mb)
    lb = jax.block_until_ready(lb)
    rmb, rlb = reference_postpool(xb, raw, N_HIDDEN, O_DIM)
    if not (jnp.allclose(mb, rmb, rtol=1e-4, atol=1e-4)
            and jnp.allclose(lb, rlb, rtol=1e-4, atol=1e-4)):
        raise AssertionError("Batched Pallas output does not match reference")

    print("KERNEL_OK")
</pallas_src>

<mosaic_0001>
module attributes {stable_mosaic.version = 11 : i64} {
  func.func @kernel(%arg0: memref<8x32xf32, #tpu.memory_space<vmem>>, %arg1: memref<176x128xf32, #tpu.memory_space<vmem>>, %arg2: memref<8x32xf32, #tpu.memory_space<vmem>>) attributes {dimension_semantics = [], scalar_prefetch = 0 : i64, scratch_operands = 0 : i64, tpu.core_type = #tpu.core_type<tc>} {
    %c0 = arith.constant 0 : index
    %c0_0 = arith.constant 0 : index
    %0 = vector.load %arg0[%c0, %c0_0] : memref<8x32xf32, #tpu.memory_space<vmem>>, vector<8x32xf32>
    %c0_1 = arith.constant 0 : index
    %c0_2 = arith.constant 0 : index
    %1 = vector.load %arg1[%c0_1, %c0_2] : memref<176x128xf32, #tpu.memory_space<vmem>>, vector<32x128xf32>
    %2 = vector.extract_strided_slice %1 {offsets = [0, 0], sizes = [32, 32], strides = [1, 1]} : vector<32x128xf32> to vector<32x32xf32>
    %c128 = arith.constant 128 : index
    %c0_3 = arith.constant 0 : index
    %3 = vector.load %arg1[%c128, %c0_3] : memref<176x128xf32, #tpu.memory_space<vmem>>, vector<1x128xf32>
    %4 = vector.extract_strided_slice %3 {offsets = [0, 0], sizes = [1, 32], strides = [1, 1]} : vector<1x128xf32> to vector<1x32xf32>
    %cst = arith.constant dense<0.000000e+00> : vector<8x32xf32>
    %5 = tpu.matmul %0, %2, %cst {dimension_numbers = #tpu.dot_dimension_numbers<[1], [0], [0], [1], [0, 0, 1, 1], [], []>} : vector<8x32xf32>, vector<32x32xf32>, vector<8x32xf32> -> vector<8x32xf32>
    %6 = vector.broadcast %4 : vector<1x32xf32> to vector<8x32xf32>
    %7 = arith.addf %5, %6 : vector<8x32xf32>
    %cst_4 = arith.constant 0.000000e+00 : f32
    %8 = vector.broadcast %cst_4 : f32 to vector<8x32xf32>
    %9 = arith.maximumf %7, %8 : vector<8x32xf32>
    %c32 = arith.constant 32 : index
    %c0_5 = arith.constant 0 : index
    %10 = vector.load %arg1[%c32, %c0_5] : memref<176x128xf32, #tpu.memory_space<vmem>>, vector<32x128xf32>
    %11 = vector.extract_strided_slice %10 {offsets = [0, 0], sizes = [32, 32], strides = [1, 1]} : vector<32x128xf32> to vector<32x32xf32>
    %c136 = arith.constant 136 : index
    %c0_6 = arith.constant 0 : index
    %12 = vector.load %arg1[%c136, %c0_6] : memref<176x128xf32, #tpu.memory_space<vmem>>, vector<1x128xf32>
    %13 = vector.extract_strided_slice %12 {offsets = [0, 0], sizes = [1, 32], strides = [1, 1]} : vector<1x128xf32> to vector<1x32xf32>
    %cst_7 = arith.constant dense<0.000000e+00> : vector<8x32xf32>
    %14 = tpu.matmul %9, %11, %cst_7 {dimension_numbers = #tpu.dot_dimension_numbers<[1], [0], [0], [1], [0, 0, 1, 1], [], []>} : vector<8x32xf32>, vector<32x32xf32>, vector<8x32xf32> -> vector<8x32xf32>
    %15 = vector.broadcast %13 : vector<1x32xf32> to vector<8x32xf32>
    %16 = arith.addf %14, %15 : vector<8x32xf32>
    %cst_8 = arith.constant 0.000000e+00 : f32
    %17 = vector.broadcast %cst_8 : f32 to vector<8x32xf32>
    %18 = arith.maximumf %16, %17 : vector<8x32xf32>
    %c64 = arith.constant 64 : index
    %c0_9 = arith.constant 0 : index
    %19 = vector.load %arg1[%c64, %c0_9] : memref<176x128xf32, #tpu.memory_space<vmem>>, vector<32x128xf32>
    %20 = vector.extract_strided_slice %19 {offsets = [0, 0], sizes = [32, 32], strides = [1, 1]} : vector<32x128xf32> to vector<32x32xf32>
    %c144 = arith.constant 144 : index
    %c0_10 = arith.constant 0 : index
    %21 = vector.load %arg1[%c144, %c0_10] : memref<176x128xf32, #tpu.memory_space<vmem>>, vector<1x128xf32>
    %22 = vector.extract_strided_slice %21 {offsets = [0, 0], sizes = [1, 32], strides = [1, 1]} : vector<1x128xf32> to vector<1x32xf32>
    %cst_11 = arith.constant dense<0.000000e+00> : vector<8x32xf32>
    %23 = tpu.matmul %18, %20, %cst_11 {dimension_numbers = #tpu.dot_dimension_numbers<[1], [0], [0], [1], [0, 0, 1, 1], [], []>} : vector<8x32xf32>, vector<32x32xf32>, vector<8x32xf32> -> vector<8x32xf32>
    %24 = vector.broadcast %22 : vector<1x32xf32> to vector<8x32xf32>
    %25 = arith.addf %23, %24 : vector<8x32xf32>
    %26 = arith.addf %25, %0 : vector<8x32xf32>
    %cst_12 = arith.constant 0.000000e+00 : f32
    %27 = vector.broadcast %cst_12 : f32 to vector<8x32xf32>
    %28 = arith.maximumf %26, %27 : vector<8x32xf32>
    %c96 = arith.constant 96 : index
    %c0_13 = arith.constant 0 : index
    %29 = vector.load %arg1[%c96, %c0_13] : memref<176x128xf32, #tpu.memory_space<vmem>>, vector<32x128xf32>
    %30 = vector.extract_strided_slice %29 {offsets = [0, 0], sizes = [32, 32], strides = [1, 1]} : vector<32x128xf32> to vector<32x32xf32>
    %c152 = arith.constant 152 : index
    %c0_14 = arith.constant 0 : index
    %31 = vector.load %arg1[%c152, %c0_14] : memref<176x128xf32, #tpu.memory_space<vmem>>, vector<1x128xf32>
    %32 = vector.extract_strided_slice %31 {offsets = [0, 0], sizes = [1, 32], strides = [1, 1]} : vector<1x128xf32> to vector<1x32xf32>
    %cst_15 = arith.constant dense<0.000000e+00> : vector<8x32xf32>
    %33 = tpu.matmul %28, %30, %cst_15 {dimension_numbers = #tpu.dot_dimension_numbers<[1], [0], [0], [1], [0, 0, 1, 1], [], []>} : vector<8x32xf32>, vector<32x32xf32>, vector<8x32xf32> -> vector<8x32xf32>
    %34 = vector.broadcast %32 : vector<1x32xf32> to vector<8x32xf32>
    %35 = arith.addf %33, %34 : vector<8x32xf32>
    %36 = vector.shape_cast %35 : vector<8x32xf32> to vector<1x8x32xf32>
    %cst_16 = arith.constant dense<0.000000e+00> : vector<1xf32>
    %37 = vector.multi_reduction <add>, %36, %cst_16 [1, 2] : vector<1x8x32xf32> to vector<1xf32>
    %38 = vector.shape_cast %37 : vector<1xf32> to vector<1x1x1xf32>
    %39 = vector.extract %38[0, 0, 0] : f32 from vector<1x1x1xf32>
    %40 = vector.broadcast %39 : f32 to vector<1x1xf32>
    %41 = arith.mulf %35, %35 : vector<8x32xf32>
    %42 = vector.shape_cast %41 : vector<8x32xf32> to vector<1x8x32xf32>
    %cst_17 = arith.constant dense<0.000000e+00> : vector<1xf32>
    %43 = vector.multi_reduction <add>, %42, %cst_17 [1, 2] : vector<1x8x32xf32> to vector<1xf32>
    %44 = vector.shape_cast %43 : vector<1xf32> to vector<1x1x1xf32>
    %45 = vector.extract %44[0, 0, 0] : f32 from vector<1x1x1xf32>
    %46 = vector.broadcast %45 : f32 to vector<1x1xf32>
    %cst_18 = arith.constant 3.906250e-03 : f32
    %47 = vector.broadcast %cst_18 : f32 to vector<1x1xf32>
    %48 = arith.mulf %40, %47 : vector<1x1xf32>
    %cst_19 = arith.constant 3.906250e-03 : f32
    %49 = vector.broadcast %cst_19 : f32 to vector<1x1xf32>
    %50 = arith.mulf %46, %49 : vector<1x1xf32>
    %51 = arith.mulf %48, %48 : vector<1x1xf32>
    %52 = arith.subf %50, %51 : vector<1x1xf32>
    %c160 = arith.constant 160 : index
    %c0_20 = arith.constant 0 : index
    %53 = vector.load %arg1[%c160, %c0_20] : memref<176x128xf32, #tpu.memory_space<vmem>>, vector<1x128xf32>
    %54 = vector.extract_strided_slice %53 {offsets = [0, 0], sizes = [1, 1], strides = [1, 1]} : vector<1x128xf32> to vector<1x1xf32>
    %c168 = arith.constant 168 : index
    %c0_21 = arith.constant 0 : index
    %55 = vector.load %arg1[%c168, %c0_21] : memref<176x128xf32, #tpu.memory_space<vmem>>, vector<1x128xf32>
    %56 = vector.extract_strided_slice %55 {offsets = [0, 0], sizes = [1, 1], strides = [1, 1]} : vector<1x128xf32> to vector<1x1xf32>
    %57 = vector.broadcast %48 : vector<1x1xf32> to vector<8x32xf32>
    %58 = arith.subf %35, %57 : vector<8x32xf32>
    %cst_22 = arith.constant 1.000000e-03 : f32
    %59 = vector.broadcast %cst_22 : f32 to vector<1x1xf32>
    %60 = arith.addf %52, %59 : vector<1x1xf32>
    %61 = math.rsqrt %60 : vector<1x1xf32>
    %62 = vector.broadcast %61 : vector<1x1xf32> to vector<8x32xf32>
    %63 = arith.mulf %58, %62 : vector<8x32xf32>
    %64 = vector.broadcast %54 : vector<1x1xf32> to vector<8x32xf32>
    %65 = arith.mulf %63, %64 : vector<8x32xf32>
    %66 = vector.broadcast %56 : vector<1x1xf32> to vector<8x32xf32>
    %67 = arith.addf %65, %66 : vector<8x32xf32>
    %c0_23 = arith.constant 0 : index
    %c0_24 = arith.constant 0 : index
    %68 = vector.load %arg2[%c0_23, %c0_24] : memref<8x32xf32, #tpu.memory_space<vmem>>, vector<8x32xf32>
    tpu.vector_store %arg2[%c0_23, %c0_24], %67 {strides = array<i32>} : memref<8x32xf32, #tpu.memory_space<vmem>>, vector<8x32xf32>,
    return
  }
}

</mosaic_0001>

<llo_original>
// kernel: post_pool_forward.1
$region0: #{post_pool_forward.1}
  #allocation0 [shape = 'u32[]', space=smem, size = 0x4, offset = 0x4, fixed_abs, tag = 'smem constant byte address 0x4 - core index']
  #allocation1 [shape = 'u32[144,128]{1,0:T(1,128)}', space=vmem, size = 0x12000, scoped, tag = 'internal scratch']
  %s0 = inlined_call_operand.hbm [shape: f32[8,32], index: 0, kind: input, shape index: {}]
  %s1 = inlined_call_operand.hbm [shape: f32[176,128], index: 1, kind: input, shape index: {}]
  %s2 = inlined_call_operand.vmem [shape: f32[8,32], index: 2, kind: output, shape index: {}]
  %s3 = sld [smem:[#allocation0]]
  $region26: #{post_pool_forward.1} parent=0
    _
  %s5 = ssub.s32 1, %s3
  %s6 = scalar_select 0, %s5, %s3
  $region1: #{post_pool_forward.1} parent=0
    #allocation2 [shape = 'u8[4096]{0}', space=vmem, size = 0x1000, scoped, tag = 'input window, operand 0, single buffered']
    #allocation3 [shape = 's32[1]{0}', space=sflag, size = 0x4, scoped, tag = 'scoped memory for post_pool_forward.1']
    #allocation4 [shape = 'u8[90112]{0}', space=vmem, size = 0x16000, scoped, tag = 'input window, operand 1, single buffered']
    #allocation5 [shape = 's32[1]{0}', space=sflag, size = 0x4, scoped, tag = 'scoped memory for post_pool_forward.1']
    %7 = vsyncpa [#allocation3], 0
    %8 = vsyncpa [#allocation5], 0
    // Predicated region
    $region2: #{post_pool_forward.1} parent=1 // pred_check
      _
    $region3: #{post_pool_forward.1} parent=1 // pred_check_branch
      %10 = sbr.rel (0) target = $region5
    $region4: #{post_pool_forward.1} parent=1 // pred_region
      %s12 = ssub.s32 128, 128
      %13 = vsyncadd [#allocation3], %s12
      %s15 = sshll.u32 [#allocation2], 4
      %s16 = int_to_ptr.vmem [resolvable:$true] %s15
      %18 = dma.hbm_to_vmem [thread:$0]  %s0, 128, %s16, [#allocation3]
    $region5: #{post_pool_forward.1} parent=1 // pred_fallthru
      _
    // Predicated region
    $region6: #{post_pool_forward.1} parent=1 // pred_check
      _
    $region7: #{post_pool_forward.1} parent=1 // pred_check_branch
      %20 = sbr.rel (0) target = $region9
    $region8: #{post_pool_forward.1} parent=1 // pred_region
      %s22 = ssub.s32 2816, 2816
      %23 = vsyncadd [#allocation5], %s22
      %s24 = sshll.u32 [#allocation4], 4
      %s25 = int_to_ptr.vmem [resolvable:$true] %s24
      %30 = dma.hbm_to_vmem [thread:$0]  %s1, 2816, %s25, [#allocation5], 128, 128, 8
    $region9: #{post_pool_forward.1} parent=1 // pred_fallthru
      _
    // Predicated region
    $region10: #{post_pool_forward.1} parent=1 // pred_check
      _
    $region11: #{post_pool_forward.1} parent=1 // pred_check_branch
      %32 = sbr.rel (0) target = $region13
    $region12: #{post_pool_forward.1} parent=1 // pred_region
      %33 = dma.done [#allocation3], 128
    $region13: #{post_pool_forward.1} parent=1 // pred_fallthru
      _
    // Predicated region
    $region14: #{post_pool_forward.1} parent=1 // pred_check
      _
    $region15: #{post_pool_forward.1} parent=1 // pred_check_branch
      %35 = sbr.rel (0) target = $region17
    $region16: #{post_pool_forward.1} parent=1 // pred_region
      %36 = dma.done [#allocation5], 2816
    $region17: #{post_pool_forward.1} parent=1 // pred_fallthru
      _
    %v37 = vld [vmem:[#allocation2] sm:$0xff]
    %v38 = vld [vmem:[#allocation4] sm:$0xff]
    %v39 = vld [vmem:[#allocation4 + $0x8] sm:$0xff]
    %v40 = vld [vmem:[#allocation4 + $0x10] sm:$0xff]
    %v41 = vld [vmem:[#allocation4 + $0x18] sm:$0xff]
    %v42 = vld [vmem:[#allocation4 + $0x80] sm:$0x1]
    %v43 = vlaneseq
    %v44 = vshrl.u32 %v43, 7
    %v45 = vsub.s32 0, %v44
    %v46 = vrot.slane %v42, %v45
    %vm47 = vcmask 261120
    %v49 = vsel %vm47, %v37, 0
    %51 = vmatprep.subr.mxu0 0.0
    %52 = vmatpush1.msra.mxu0 0.0
    %53 = vmatprep.subr.mxu0 0.0
    %54 = vmatpush1.msra.mxu0 0.0
    %55 = vmatprep.subr.mxu0 0.0
    %56 = vmatpush1.msra.mxu0 0.0
    %57 = vmatprep.subr.mxu0 0.0
    %58 = vmatpush1.msra.mxu0 0.0
    %59 = vmatprep.subr.mxu0 0.0
    %60 = vmatpush1.msra.mxu0 0.0
    %61 = vmatprep.subr.mxu0 0.0
    %62 = vmatpush1.msra.mxu0 0.0
    %63 = vmatprep.subr.mxu0 0.0
    %64 = vmatpush1.msra.mxu0 0.0
    %65 = vmatprep.subr.mxu0 0.0
    %66 = vmatpush1.msra.mxu0 0.0
    %67 = vmatprep.subr.mxu0 0.0
    %68 = vmatpush1.msra.mxu0 0.0
    %69 = vmatprep.subr.mxu0 0.0
    %70 = vmatpush1.msra.mxu0 0.0
    %71 = vmatprep.subr.mxu0 0.0
    %72 = vmatpush1.msra.mxu0 0.0
    %73 = vmatprep.subr.mxu0 0.0
    %74 = vmatpush1.msra.mxu0 0.0
    %75 = vmatprep.subr.mxu0 0.0
    %76 = vmatpush1.msra.mxu0 %v41
    %77 = vmatprep.subr.mxu0 0.0
    %78 = vmatpush1.msra.mxu0 %v40
    %79 = vmatprep.subr.mxu0 0.0
    %80 = vmatpush1.msra.mxu0 %v39
    %81 = vmatprep.subr.mxu0 0.0
    %82 = vmatpush1.msra.mxu0 %v38
    %83 = vmatprep.subr.mxu0 0.0
    %84 = vmatpush2.msra.mxu0 0.0
    %85 = vmatprep.subr.mxu0 0.0
    %86 = vmatpush2.msra.mxu0 0.0
    %87 = vmatprep.subr.mxu0 0.0
    %88 = vmatpush2.msra.mxu0 0.0
    %89 = vmatprep.subr.mxu0 0.0
    %90 = vmatpush2.msra.mxu0 0.0
    %91 = vmatprep.subr.mxu0 0.0
    %92 = vmatpush2.msra.mxu0 0.0
    %93 = vmatprep.subr.mxu0 0.0
    %94 = vmatpush2.msra.mxu0 0.0
    %95 = vmatprep.subr.mxu0 0.0
    %96 = vmatpush2.msra.mxu0 0.0
    %97 = vmatprep.subr.mxu0 0.0
    %98 = vmatpush2.msra.mxu0 0.0
    %99 = vmatprep.subr.mxu0 0.0
    %100 = vmatpush2.msra.mxu0 0.0
    %101 = vmatprep.subr.mxu0 0.0
    %102 = vmatpush2.msra.mxu0 0.0
    %103 = vmatprep.subr.mxu0 0.0
    %104 = vmatpush2.msra.mxu0 0.0
    %105 = vmatprep.subr.mxu0 0.0
    %106 = vmatpush2.msra.mxu0 0.0
    %107 = vmatprep.subr.mxu0 0.0
    %108 = vmatpush2.msra.mxu0 0.0
    %109 = vmatprep.subr.mxu0 0.0
    %110 = vmatpush2.msra.mxu0 0.0
    %111 = vmatprep.subr.mxu0 0.0
    %112 = vmatpush2.msra.mxu0 0.0
    %113 = vmatprep.subr.mxu0 0.0
    %114 = vmatpush2.msra.mxu0 0.0
    %115 = vmatprep.mubr.f32.mxu0 0.0
    %116 = vmatmul.mubr.f32.gmra.mxu0 %v49
    %v117 = vpop.f32.mrf.mxu0
    %v118 = vadd.f32 %v46, %v117
    %v119 = vpop.f32.mrf.mxu0
    %120 = vdwg.mxu0
    %v121 = vmax.f32 %v118, 0.0
    %v122 = vld [vmem:[#allocation4 + $0x20] sm:$0xff]
    %v123 = vld [vmem:[#allocation4 + $0x28] sm:$0xff]
    %v124 = vld [vmem:[#allocation4 + $0x30] sm:$0xff]
    %v125 = vld [vmem:[#allocation4 + $0x38] sm:$0xff]
    %v126 = vld [vmem:[#allocation4 + $0x88] sm:$0x1]
    %v127 = vlaneseq
    %v128 = vshrl.u32 %v127, 7
    %v129 = vsub.s32 0, %v128
    %v130 = vrot.slane %v126, %v129
    %v132 = vsel %vm47, %v121, 0
    %134 = vmatprep.subr.mxu0 0.0
    %135 = vmatpush1.msra.mxu0 0.0
    %136 = vmatprep.subr.mxu0 0.0
    %137 = vmatpush1.msra.mxu0 0.0
    %138 = vmatprep.subr.mxu0 0.0
    %139 = vmatpush1.msra.mxu0 0.0
    %140 = vmatprep.subr.mxu0 0.0
    %141 = vmatpush1.msra.mxu0 0.0
    %142 = vmatprep.subr.mxu0 0.0
    %143 = vmatpush1.msra.mxu0 0.0
    %144 = vmatprep.subr.mxu0 0.0
    %145 = vmatpush1.msra.mxu0 0.0
    %146 = vmatprep.subr.mxu0 0.0
    %147 = vmatpush1.msra.mxu0 0.0
    %148 = vmatprep.subr.mxu0 0.0
    %149 = vmatpush1.msra.mxu0 0.0
    %150 = vmatprep.subr.mxu0 0.0
    %151 = vmatpush1.msra.mxu0 0.0
    %152 = vmatprep.subr.mxu0 0.0
    %153 = vmatpush1.msra.mxu0 0.0
    %154 = vmatprep.subr.mxu0 0.0
    %155 = vmatpush1.msra.mxu0 0.0
    %156 = vmatprep.subr.mxu0 0.0
    %157 = vmatpush1.msra.mxu0 0.0
    %158 = vmatprep.subr.mxu0 0.0
    %159 = vmatpush1.msra.mxu0 %v125
    %160 = vmatprep.subr.mxu0 0.0
    %161 = vmatpush1.msra.mxu0 %v124
    %162 = vmatprep.subr.mxu0 0.0
    %163 = vmatpush1.msra.mxu0 %v123
    %164 = vmatprep.subr.mxu0 0.0
    %165 = vmatpush1.msra.mxu0 %v122
    %166 = vmatprep.subr.mxu0 0.0
    %167 = vmatpush2.msra.mxu0 0.0
    %168 = vmatprep.subr.mxu0 0.0
    %169 = vmatpush2.msra.mxu0 0.0
    %170 = vmatprep.subr.mxu0 0.0
    %171 = vmatpush2.msra.mxu0 0.0
    %172 = vmatprep.subr.mxu0 0.0
    %173 = vmatpush2.msra.mxu0 0.0
    %174 = vmatprep.subr.mxu0 0.0
    %175 = vmatpush2.msra.mxu0 0.0
    %176 = vmatprep.subr.mxu0 0.0
    %177 = vmatpush2.msra.mxu0 0.0
    %178 = vmatprep.subr.mxu0 0.0
    %179 = vmatpush2.msra.mxu0 0.0
    %180 = vmatprep.subr.mxu0 0.0
    %181 = vmatpush2.msra.mxu0 0.0
    %182 = vmatprep.subr.mxu0 0.0
    %183 = vmatpush2.msra.mxu0 0.0
    %184 = vmatprep.subr.mxu0 0.0
    %185 = vmatpush2.msra.mxu0 0.0
    %186 = vmatprep.subr.mxu0 0.0
    %187 = vmatpush2.msra.mxu0 0.0
    %188 = vmatprep.subr.mxu0 0.0
    %189 = vmatpush2.msra.mxu0 0.0
    %190 = vmatprep.subr.mxu0 0.0
    %191 = vmatpush2.msra.mxu0 0.0
    %192 = vmatprep.subr.mxu0 0.0
    %193 = vmatpush2.msra.mxu0 0.0
    %194 = vmatprep.subr.mxu0 0.0
    %195 = vmatpush2.msra.mxu0 0.0
    %196 = vmatprep.subr.mxu0 0.0
    %197 = vmatpush2.msra.mxu0 0.0
    %198 = vmatprep.mubr.f32.mxu0 0.0
    %199 = vmatmul.mubr.f32.gmra.mxu0 %v132
    %v200 = vpop.f32.mrf.mxu0
    %v201 = vadd.f32 %v130, %v200
    %v202 = vpop.f32.mrf.mxu0
    %203 = vdwg.mxu0
    %v204 = vmax.f32 %v201, 0.0
    %v205 = vld [vmem:[#allocation4 + $0x40] sm:$0xff]
    %v206 = vld [vmem:[#allocation4 + $0x48] sm:$0xff]
    %v207 = vld [vmem:[#allocation4 + $0x50] sm:$0xff]
    %v208 = vld [vmem:[#allocation4 + $0x58] sm:$0xff]
    %v209 = vld [vmem:[#allocation4 + $0x90] sm:$0x1]
    %v210 = vlaneseq
    %v211 = vshrl.u32 %v210, 7
    %v212 = vsub.s32 0, %v211
    %v213 = vrot.slane %v209, %v212
    %v215 = vsel %vm47, %v204, 0
    %217 = vmatprep.subr.mxu0 0.0
    %218 = vmatpush1.msra.mxu0 0.0
    %219 = vmatprep.subr.mxu0 0.0
    %220 = vmatpush1.msra.mxu0 0.0
    %221 = vmatprep.subr.mxu0 0.0
    %222 = vmatpush1.msra.mxu0 0.0
    %223 = vmatprep.subr.mxu0 0.0
    %224 = vmatpush1.msra.mxu0 0.0
    %225 = vmatprep.subr.mxu0 0.0
    %226 = vmatpush1.msra.mxu0 0.0
    %227 = vmatprep.subr.mxu0 0.0
    %228 = vmatpush1.msra.mxu0 0.0
    %229 = vmatprep.subr.mxu0 0.0
    %230 = vmatpush1.msra.mxu0 0.0
    %231 = vmatprep.subr.mxu0 0.0
    %232 = vmatpush1.msra.mxu0 0.0
    %233 = vmatprep.subr.mxu0 0.0
    %234 = vmatpush1.msra.mxu0 0.0
    %235 = vmatprep.subr.mxu0 0.0
    %236 = vmatpush1.msra.mxu0 0.0
    %237 = vmatprep.subr.mxu0 0.0
    %238 = vmatpush1.msra.mxu0 0.0
    %239 = vmatprep.subr.mxu0 0.0
    %240 = vmatpush1.msra.mxu0 0.0
    %241 = vmatprep.subr.mxu0 0.0
    %242 = vmatpush1.msra.mxu0 %v208
    %243 = vmatprep.subr.mxu0 0.0
    %244 = vmatpush1.msra.mxu0 %v207
    %245 = vmatprep.subr.mxu0 0.0
    %246 = vmatpush1.msra.mxu0 %v206
    %247 = vmatprep.subr.mxu0 0.0
    %248 = vmatpush1.msra.mxu0 %v205
    %249 = vmatprep.subr.mxu0 0.0
    %250 = vmatpush2.msra.mxu0 0.0
    %251 = vmatprep.subr.mxu0 0.0
    %252 = vmatpush2.msra.mxu0 0.0
    %253 = vmatprep.subr.mxu0 0.0
    %254 = vmatpush2.msra.mxu0 0.0
    %255 = vmatprep.subr.mxu0 0.0
    %256 = vmatpush2.msra.mxu0 0.0
    %257 = vmatprep.subr.mxu0 0.0
    %258 = vmatpush2.msra.mxu0 0.0
    %259 = vmatprep.subr.mxu0 0.0
    %260 = vmatpush2.msra.mxu0 0.0
    %261 = vmatprep.subr.mxu0 0.0
    %262 = vmatpush2.msra.mxu0 0.0
    %263 = vmatprep.subr.mxu0 0.0
    %264 = vmatpush2.msra.mxu0 0.0
    %265 = vmatprep.subr.mxu0 0.0
    %266 = vmatpush2.msra.mxu0 0.0
    %267 = vmatprep.subr.mxu0 0.0
    %268 = vmatpush2.msra.mxu0 0.0
    %269 = vmatprep.subr.mxu0 0.0
    %270 = vmatpush2.msra.mxu0 0.0
    %271 = vmatprep.subr.mxu0 0.0
    %272 = vmatpush2.msra.mxu0 0.0
    %273 = vmatprep.subr.mxu0 0.0
    %274 = vmatpush2.msra.mxu0 0.0
    %275 = vmatprep.subr.mxu0 0.0
    %276 = vmatpush2.msra.mxu0 0.0
    %277 = vmatprep.subr.mxu0 0.0
    %278 = vmatpush2.msra.mxu0 0.0
    %279 = vmatprep.subr.mxu0 0.0
    %280 = vmatpush2.msra.mxu0 0.0
    %281 = vmatprep.mubr.f32.mxu0 0.0
    %282 = vmatmul.mubr.f32.gmra.mxu0 %v215
    %v283 = vpop.f32.mrf.mxu0
    %v284 = vadd.f32 %v213, %v283
    %v285 = vpop.f32.mrf.mxu0
    %286 = vdwg.mxu0
    %v287 = vadd.f32 %v284, %v37
    %v288 = vmax.f32 %v287, 0.0
    %v289 = vld [vmem:[#allocation4 + $0x60] sm:$0xff]
    %v290 = vld [vmem:[#allocation4 + $0x68] sm:$0xff]
    %v291 = vld [vmem:[#allocation4 + $0x70] sm:$0xff]
    %v292 = vld [vmem:[#allocation4 + $0x78] sm:$0xff]
    %v293 = vld [vmem:[#allocation4 + $0x98] sm:$0x1]
    %v294 = vlaneseq
    %v295 = vshrl.u32 %v294, 7
    %v296 = vsub.s32 0, %v295
    %v297 = vrot.slane %v293, %v296
    %v299 = vsel %vm47, %v288, 0
    %301 = vmatprep.subr.mxu0 0.0
    %302 = vmatpush1.msra.mxu0 0.0
    %303 = vmatprep.subr.mxu0 0.0
    %304 = vmatpush1.msra.mxu0 0.0
    %305 = vmatprep.subr.mxu0 0.0
    %306 = vmatpush1.msra.mxu0 0.0
    %307 = vmatprep.subr.mxu0 0.0
    %308 = vmatpush1.msra.mxu0 0.0
    %309 = vmatprep.subr.mxu0 0.0
    %310 = vmatpush1.msra.mxu0 0.0
    %311 = vmatprep.subr.mxu0 0.0
    %312 = vmatpush1.msra.mxu0 0.0
    %313 = vmatprep.subr.mxu0 0.0
    %314 = vmatpush1.msra.mxu0 0.0
    %315 = vmatprep.subr.mxu0 0.0
    %316 = vmatpush1.msra.mxu0 0.0
    %317 = vmatprep.subr.mxu0 0.0
    %318 = vmatpush1.msra.mxu0 0.0
    %319 = vmatprep.subr.mxu0 0.0
    %320 = vmatpush1.msra.mxu0 0.0
    %321 = vmatprep.subr.mxu0 0.0
    %322 = vmatpush1.msra.mxu0 0.0
    %323 = vmatprep.subr.mxu0 0.0
    %324 = vmatpush1.msra.mxu0 0.0
    %325 = vmatprep.subr.mxu0 0.0
    %326 = vmatpush1.msra.mxu0 %v292
    %327 = vmatprep.subr.mxu0 0.0
    %328 = vmatpush1.msra.mxu0 %v291
    %329 = vmatprep.subr.mxu0 0.0
    %330 = vmatpush1.msra.mxu0 %v290
    %331 = vmatprep.subr.mxu0 0.0
    %332 = vmatpush1.msra.mxu0 %v289
    %333 = vmatprep.subr.mxu0 0.0
    %334 = vmatpush2.msra.mxu0 0.0
    %335 = vmatprep.subr.mxu0 0.0
    %336 = vmatpush2.msra.mxu0 0.0
    %337 = vmatprep.subr.mxu0 0.0
    %338 = vmatpush2.msra.mxu0 0.0
    %339 = vmatprep.subr.mxu0 0.0
    %340 = vmatpush2.msra.mxu0 0.0
    %341 = vmatprep.subr.mxu0 0.0
    %342 = vmatpush2.msra.mxu0 0.0
    %343 = vmatprep.subr.mxu0 0.0
    %344 = vmatpush2.msra.mxu0 0.0
    %345 = vmatprep.subr.mxu0 0.0
    %346 = vmatpush2.msra.mxu0 0.0
    %347 = vmatprep.subr.mxu0 0.0
    %348 = vmatpush2.msra.mxu0 0.0
    %349 = vmatprep.subr.mxu0 0.0
    %350 = vmatpush2.msra.mxu0 0.0
    %351 = vmatprep.subr.mxu0 0.0
    %352 = vmatpush2.msra.mxu0 0.0
    %353 = vmatprep.subr.mxu0 0.0
    %354 = vmatpush2.msra.mxu0 0.0
    %355 = vmatprep.subr.mxu0 0.0
    %356 = vmatpush2.msra.mxu0 0.0
    %357 = vmatprep.subr.mxu0 0.0
    %358 = vmatpush2.msra.mxu0 0.0
    %359 = vmatprep.subr.mxu0 0.0
    %360 = vmatpush2.msra.mxu0 0.0
    %361 = vmatprep.subr.mxu0 0.0
    %362 = vmatpush2.msra.mxu0 0.0
    %363 = vmatprep.subr.mxu0 0.0
    %364 = vmatpush2.msra.mxu0 0.0
    %365 = vmatprep.mubr.f32.mxu0 0.0
    %366 = vmatmul.mubr.f32.gmra.mxu0 %v299
    %v367 = vpop.f32.mrf.mxu0
    %v368 = vadd.f32 %v297, %v367
    %v369 = vpop.f32.mrf.mxu0
    %370 = vdwg.mxu0
    %v371 = vsel %vm47, %v368, 0.0
    %372 = vadd.xlane.f32.xlu0 %v371
    %v373 = vpop.xlane.xlu0 %372
    %v374 = vrot.slane %v373, 4
    %v375 = vadd.f32 %v373, %v374
    %v376 = vrot.slane %v375, 2
    %v377 = vadd.f32 %v375, %v376
    %v378 = vrot.slane %v377, 1
    %v379 = vadd.f32 %v377, %v378
    %s380 = vtos %v379
    %v381 = vstv %s380
    %v382 = vmul.f32 %v368, %v368
    %v383 = vsel %vm47, %v382, 0.0
    %384 = vadd.xlane.f32.xlu0 %v383
    %v385 = vpop.xlane.xlu0 %384
    %v386 = vrot.slane %v385, 4
    %v387 = vadd.f32 %v385, %v386
    %v388 = vrot.slane %v387, 2
    %v389 = vadd.f32 %v387, %v388
    %v390 = vrot.slane %v389, 1
    %v391 = vadd.f32 %v389, %v390
    %s392 = vtos %v391
    %v393 = vstv %s392
    %v394 = vmul.f32 %v381, 0.00390625
    %v395 = vmul.f32 %v393, 0.00390625
    %v396 = vmul.f32 %v394, %v394
    %v397 = vsub.f32 %v395, %v396
    %v398 = vld [vmem:[#allocation4 + $0xa0] sm:$0x1]
    %v399 = vld [vmem:[#allocation4 + $0xa8] sm:$0x1]
    %v400 = vsub.f32 %v368, %v394
    %v401 = vadd.f32 %v397, 0.001
    %v402 = vrsqrt.pop %v401
    %v403 = vmul.f32 %v400, %v402
    %s405 = vtos %v398
    %v406 = vstv %s405
    %v408 = vmul.f32 %v403, %v406
    %s410 = vtos %v399
    %v411 = vstv %s410
    %v413 = vadd.f32 %v408, %v411
    %414 = vst.msk [vmem:[%s2] sm:$0xff] %vm47, %v413
    // Predicated region
    $region18: #{post_pool_forward.1} parent=1 // pred_check
      _
    $region19: #{post_pool_forward.1} parent=1 // pred_check_branch
      %416 = sbr.rel (0) target = $region21
    $region20: #{post_pool_forward.1} parent=1 // pred_region
      _
    $region21: #{post_pool_forward.1} parent=1 // pred_fallthru
      _
    // Predicated region
    $region22: #{post_pool_forward.1} parent=1 // pred_check
      _
    $region23: #{post_pool_forward.1} parent=1 // pred_check_branch
      %418 = sbr.rel (0) target = $region25
    $region24: #{post_pool_forward.1} parent=1 // pred_region
      _
    $region25: #{post_pool_forward.1} parent=1 // pred_fallthru
      _
    %419 = vsyncpa [#allocation3], 1
    %420 = vsyncpa [#allocation5], 1

</llo_original>
